<compile_context>
chip_gen: v7x
topology: tpu7x:2x2x1
jax: 0.10.0
libtpu: 0.0.40
codegen_flags: <defaults>
</compile_context>

<pallas_src>
import functools

import numpy as np
import jax
import jax.numpy as jnp
from jax.experimental import pallas as pl
from jax.experimental.pallas import tpu as pltpu


# ----------------------------------------------------------------------------
# Pallas kernel: batched primal-dual interior-point QP solver (arrowhead form)
# ----------------------------------------------------------------------------
def _newsvendor_qp_kernel(d_ref, y_ref, out_ref, *,
                          c_quad, b_quad, h_quad, c_lin, b_lin, h_lin,
                          n_iters, sigma):
    f32 = jnp.float32
    y = y_ref[...]                       # (k, TB)  -- batch on the lane axis
    k, TB = y.shape
    m = 4 * k + 1
    inv_m = 1.0 / m

    big = f32(1e30)
    s_floor = f32(1e-12)                 # backstop only; freeze fires first
    gap_tol = f32(1e-8)

    d = jnp.broadcast_to(d_ref[...], (k, TB))   # hoisted lane-broadcast

    # per-batch QP data (scalars stay splat constants)
    q0 = f32(c_quad)
    p0 = f32(c_lin)
    qb = f32(b_quad) * (y + 1e-8)
    qh = f32(h_quad) * (y + 1e-8)
    pb = f32(b_lin) * y
    ph = f32(h_lin) * y

    # NOTE: plain f32 divides (EUP reciprocal + refine).  pl.reciprocal(
    # approx=True) on the step-length / 1/s paths is a further micro-opt.
    def ratio(xv, dv):
        neg = dv < 0.0
        dsafe = jnp.where(neg, dv, -1.0)
        return jnp.where(neg, -xv / dsafe, big)

    def body(_, carry):
        (z0, zb, zh, l1, l2, l0, lb, lh, s1, s2, s0, sb, sh) = carry

        # ---- residuals (sparse G: <= 2 nonzeros per row) ------------------
        rd0 = (q0 * z0 + p0
               - jnp.sum(l1, axis=0, keepdims=True)
               + jnp.sum(l2, axis=0, keepdims=True) - l0)
        rdb = qb * zb + pb - l1 - lb
        rdh = qh * zh + ph - l2 - lh

        rp1 = d - z0 - zb + s1
        rp2 = z0 - zh + s2 - d
        rp0 = s0 - z0
        rpb = sb - zb
        rph = sh - zh

        gap = (jnp.sum(l1 * s1 + l2 * s2 + lb * sb + lh * sh,
                       axis=0, keepdims=True) + l0 * s0) * inv_m
        mu = sigma * gap
        muB = jnp.broadcast_to(mu, (k, TB))

        # safeguarded reciprocals of slacks
        inv_s1 = 1.0 / jnp.maximum(s1, s_floor)
        inv_s2 = 1.0 / jnp.maximum(s2, s_floor)
        inv_s0 = 1.0 / jnp.maximum(s0, s_floor)
        inv_sb = 1.0 / jnp.maximum(sb, s_floor)
        inv_sh = 1.0 / jnp.maximum(sh, s_floor)

        w1 = l1 * inv_s1; w2 = l2 * inv_s2; w0 = l0 * inv_s0
        wb = lb * inv_sb; wh = lh * inv_sh

        rc1 = l1 * s1 - muB; rc2 = l2 * s2 - muB; rc0 = l0 * s0 - mu
        rcb = lb * sb - muB; rch = lh * sh - muB

        v1 = (l1 * rp1 - rc1) * inv_s1
        v2 = (l2 * rp2 - rc2) * inv_s2
        v0 = (l0 * rp0 - rc0) * inv_s0
        vb = (lb * rpb - rcb) * inv_sb
        vh = (lh * rph - rch) * inv_sh

        # condensed rhs = -rd - G^T v      (G^T applied sparsely)
        r0 = (-rd0 + jnp.sum(v1, axis=0, keepdims=True)
              - jnp.sum(v2, axis=0, keepdims=True) + v0)
        rb = -rdb + v1 + vb
        rh = -rdh + v2 + vh

        # ---- arrowhead solve of (diag(q) + G^T W G) dz = r ----------------
        Db = qb + w1 + wb
        Dh = qh + w2 + wh
        invDb = 1.0 / Db
        invDh = 1.0 / Dh
        # cancellation-free Schur complement: always >= q0 > 0
        schur = (q0 + w0
                 + jnp.sum(w1 * (qb + wb) * invDb, axis=0, keepdims=True)
                 + jnp.sum(w2 * (qh + wh) * invDh, axis=0, keepdims=True))
        t = (r0 - jnp.sum(w1 * rb * invDb, axis=0, keepdims=True)
             + jnp.sum(w2 * rh * invDh, axis=0, keepdims=True))
        dz0 = t / schur
        dz0B = jnp.broadcast_to(dz0, (k, TB))
        dzb = (rb - w1 * dz0B) * invDb
        dzh = (rh + w2 * dz0B) * invDh

        # G dz (sparse)
        g1 = -(dz0B + dzb)
        g2 = dz0B - dzh
        g0 = -dz0
        gb = -dzb
        gh = -dzh

        dl1 = (l1 * (g1 + rp1) - rc1) * inv_s1
        dl2 = (l2 * (g2 + rp2) - rc2) * inv_s2
        dl0 = (l0 * (g0 + rp0) - rc0) * inv_s0
        dlb = (lb * (gb + rpb) - rcb) * inv_sb
        dlh = (lh * (gh + rph) - rch) * inv_sh

        ds1 = -rp1 - g1
        ds2 = -rp2 - g2
        ds0 = -rp0 - g0
        dsb = -rpb - gb
        dsh = -rph - gh

        # ---- fused fraction-to-boundary step length -----------------------
        cand = jnp.minimum(
            jnp.minimum(jnp.minimum(ratio(l1, dl1), ratio(l2, dl2)),
                        jnp.minimum(ratio(lb, dlb), ratio(lh, dlh))),
            jnp.minimum(jnp.minimum(ratio(s1, ds1), ratio(s2, ds2)),
                        jnp.minimum(ratio(sb, dsb), ratio(sh, dsh))))
        amin = jnp.minimum(jnp.min(cand, axis=0, keepdims=True),
                           jnp.minimum(ratio(l0, dl0), ratio(s0, ds0)))
        alpha = jnp.minimum(1.0, 0.99 * amin)
        # freeze converged rows -> prevents late-iteration f32 blow-ups
        alpha = jnp.where(gap > gap_tol, alpha, 0.0)
        alphaB = jnp.broadcast_to(alpha, (k, TB))

        return (z0 + alpha * dz0, zb + alphaB * dzb, zh + alphaB * dzh,
                l1 + alphaB * dl1, l2 + alphaB * dl2, l0 + alpha * dl0,
                lb + alphaB * dlb, lh + alphaB * dlh,
                s1 + alphaB * ds1, s2 + alphaB * ds2, s0 + alpha * ds0,
                sb + alphaB * dsb, sh + alphaB * dsh)

    zeros1 = jnp.zeros((1, TB), f32)
    zerosk = jnp.zeros((k, TB), f32)
    ones1 = jnp.ones((1, TB), f32)
    onesk = jnp.ones((k, TB), f32)
    carry0 = (zeros1, zerosk, zerosk,                 # z0, zb, zh
              onesk, onesk, ones1, onesk, onesk,      # lam
              onesk, onesk, ones1, onesk, onesk)      # s
    final = jax.lax.fori_loop(0, n_iters, body, carry0)

    out_ref[...] = final[0].astype(out_ref.dtype)     # z0, lane-dense (1, TB)


# ----------------------------------------------------------------------------
# Wrapper: builds the QP data exactly as SolveNewsvendor.forward, calls kernel
# ----------------------------------------------------------------------------
def make_solve_newsvendor(params, eps=0.01, n_iters=40, sigma=0.1):
    d_np = np.asarray(params['d'], dtype=np.float32)
    k = int(d_np.shape[0])
    d_col = jnp.asarray(d_np.reshape(k, 1))
    # NOTE: eps / eps_eye from the reference __init__ are unused in forward().

    kernel = functools.partial(
        _newsvendor_qp_kernel,
        c_quad=float(params['c_quad']), b_quad=float(params['b_quad']),
        h_quad=float(params['h_quad']), c_lin=float(params['c_lin']),
        b_lin=float(params['b_lin']), h_lin=float(params['h_lin']),
        n_iters=int(n_iters), sigma=float(sigma))

    @jax.jit
    def forward(y):
        y = y.astype(jnp.float32)
        B = y.shape[0]
        assert y.shape[1] == k
        # batch on the 128-lane axis; pad to a lane-aligned tile
        TB = 512 if B > 512 else max(128, -(-B // 128) * 128)
        B_pad = -(-B // TB) * TB
        y_t = jnp.transpose(y)                                 # (k, B)
        if B_pad != B:
            # padded rows use a benign uniform distribution; sliced off below
            y_t = jnp.concatenate(
                [y_t, jnp.full((k, B_pad - B), 1.0 / k, jnp.float32)], axis=1)

        out = pl.pallas_call(
            kernel,
            out_shape=jax.ShapeDtypeStruct((1, B_pad), jnp.float32),
            grid=(B_pad // TB,),
            in_specs=[pl.BlockSpec((k, 1), lambda i: (0, 0)),      # d
                      pl.BlockSpec((k, TB), lambda i: (0, i))],    # y (batch tiled)
            out_specs=pl.BlockSpec((1, TB), lambda i: (0, i)),
            compiler_params=pltpu.CompilerParams(
                dimension_semantics=("parallel",)),
        )(d_col, y_t)                                          # (1, B_pad)

        return jnp.transpose(out[:, :B])                       # (B, 1) == out[:, :1]

    return forward


# ----------------------------------------------------------------------------
if __name__ == "__main__":
    # deterministic synthetic newsvendor parameters (module __init__ shapes)
    k = 8
    params = {
        'd': np.linspace(1.0, 10.0, k).astype(np.float32),  # demand support
        'c_lin': 10.0, 'b_lin': 30.0, 'h_lin': 10.0,
        'c_quad': 2.0, 'b_quad': 14.0, 'h_quad': 2.0,
    }
    solve = make_solve_newsvendor(params)

    # deterministic input: batch of demand-probability vectors, shape (2, 8)
    key = jax.random.PRNGKey(0)
    logits = jax.random.normal(key, (2, k), dtype=jnp.float32)
    y = jax.nn.softmax(logits, axis=-1)

    out = jax.block_until_ready(solve(y))

    assert out.shape == (2, 1) and out.dtype == jnp.float32
    assert bool(jnp.all(jnp.isfinite(out)))
    # order quantity must be nonnegative and within the demand support range
    assert bool(jnp.all(out >= -1e-3)) and bool(jnp.all(out <= params['d'].max() + 1.0))
    print("KERNEL_OK")
</pallas_src>

<mosaic_0001>
module attributes {stable_mosaic.version = 11 : i64} {
  func.func @_newsvendor_qp_kernel(%arg0: i32, %arg1: memref<8x1xf32, #tpu.memory_space<vmem>>, %arg2: memref<8x128xf32, #tpu.memory_space<vmem>>, %arg3: memref<1x128xf32, #tpu.memory_space<vmem>>) attributes {dimension_semantics = [#tpu.dimension_semantics<parallel>], iteration_bounds = array<i64: 1>, scalar_prefetch = 0 : i64, scratch_operands = 0 : i64, tpu.core_type = #tpu.core_type<tc>, window_params = [{pipeline_mode = #tpu.pipeline_mode<synchronous>, transform_indices = @transform_0, window_bounds = array<i64: 8, 1>}, {transform_indices = @transform_1, window_bounds = array<i64: 8, 128>}, {transform_indices = @transform_2, window_bounds = array<i64: 1, 128>}]} {
    %c0 = arith.constant 0 : index
    %c0_0 = arith.constant 0 : index
    %0 = vector.load %arg2[%c0, %c0_0] : memref<8x128xf32, #tpu.memory_space<vmem>>, vector<8x128xf32>
    %c0_1 = arith.constant 0 : index
    %c0_2 = arith.constant 0 : index
    %1 = vector.load %arg1[%c0_1, %c0_2] : memref<8x1xf32, #tpu.memory_space<vmem>>, vector<8x1xf32>
    %2 = vector.shape_cast %1 : vector<8x1xf32> to vector<8x1xf32>
    %3 = vector.broadcast %2 : vector<8x1xf32> to vector<8x128xf32>
    %cst = arith.constant 9.99999993E-9 : f32
    %4 = vector.broadcast %cst : f32 to vector<8x128xf32>
    %5 = arith.addf %0, %4 : vector<8x128xf32>
    %cst_3 = arith.constant 1.400000e+01 : f32
    %6 = vector.broadcast %cst_3 : f32 to vector<8x128xf32>
    %7 = arith.mulf %6, %5 : vector<8x128xf32>
    %cst_4 = arith.constant 9.99999993E-9 : f32
    %8 = vector.broadcast %cst_4 : f32 to vector<8x128xf32>
    %9 = arith.addf %0, %8 : vector<8x128xf32>
    %cst_5 = arith.constant 2.000000e+00 : f32
    %10 = vector.broadcast %cst_5 : f32 to vector<8x128xf32>
    %11 = arith.mulf %10, %9 : vector<8x128xf32>
    %cst_6 = arith.constant 3.000000e+01 : f32
    %12 = vector.broadcast %cst_6 : f32 to vector<8x128xf32>
    %13 = arith.mulf %12, %0 : vector<8x128xf32>
    %cst_7 = arith.constant 1.000000e+01 : f32
    %14 = vector.broadcast %cst_7 : f32 to vector<8x128xf32>
    %15 = arith.mulf %14, %0 : vector<8x128xf32>
    %cst_8 = arith.constant 0.000000e+00 : f32
    %16 = vector.broadcast %cst_8 : f32 to vector<1x128xf32>
    %cst_9 = arith.constant 0.000000e+00 : f32
    %17 = vector.broadcast %cst_9 : f32 to vector<8x128xf32>
    %cst_10 = arith.constant 1.000000e+00 : f32
    %18 = vector.broadcast %cst_10 : f32 to vector<1x128xf32>
    %cst_11 = arith.constant 1.000000e+00 : f32
    %19 = vector.broadcast %cst_11 : f32 to vector<8x128xf32>
    %cst_12 = arith.constant 2.000000e+00 : f32
    %cst_13 = arith.constant 1.000000e+01 : f32
    %cst_14 = arith.constant 9.99999996E-13 : f32
    %cst_15 = arith.constant 1.000000e+30 : f32
    %cst_16 = arith.constant 9.99999993E-9 : f32
    %c0_i32 = arith.constant 0 : i32
    %c40_i32 = arith.constant 40 : i32
    %20 = arith.addi %c0_i32, %c40_i32 : i32
    %c1_i32 = arith.constant 1 : i32
    %21:13 = scf.for %arg4 = %c0_i32 to %20 step %c1_i32 iter_args(%arg5 = %16, %arg6 = %17, %arg7 = %17, %arg8 = %19, %arg9 = %19, %arg10 = %18, %arg11 = %19, %arg12 = %19, %arg13 = %19, %arg14 = %19, %arg15 = %18, %arg16 = %19, %arg17 = %19) -> (vector<1x128xf32>, vector<8x128xf32>, vector<8x128xf32>, vector<8x128xf32>, vector<8x128xf32>, vector<1x128xf32>, vector<8x128xf32>, vector<8x128xf32>, vector<8x128xf32>, vector<8x128xf32>, vector<1x128xf32>, vector<8x128xf32>, vector<8x128xf32>)  : i32 {
      %23 = vector.broadcast %cst_12 : f32 to vector<1x128xf32>
      %24 = arith.mulf %23, %arg5 : vector<1x128xf32>
      %25 = vector.broadcast %cst_13 : f32 to vector<1x128xf32>
      %26 = arith.addf %24, %25 : vector<1x128xf32>
      %cst_19 = arith.constant dense<0.000000e+00> : vector<128xf32>
      %27 = vector.multi_reduction <add>, %arg8, %cst_19 [0] : vector<8x128xf32> to vector<128xf32>
      %28 = vector.shape_cast %27 : vector<128xf32> to vector<1x128xf32>
      %29 = arith.subf %26, %28 : vector<1x128xf32>
      %cst_20 = arith.constant dense<0.000000e+00> : vector<128xf32>
      %30 = vector.multi_reduction <add>, %arg9, %cst_20 [0] : vector<8x128xf32> to vector<128xf32>
      %31 = vector.shape_cast %30 : vector<128xf32> to vector<1x128xf32>
      %32 = arith.addf %29, %31 : vector<1x128xf32>
      %33 = arith.subf %32, %arg10 : vector<1x128xf32>
      %34 = arith.mulf %7, %arg6 : vector<8x128xf32>
      %35 = arith.addf %34, %13 : vector<8x128xf32>
      %36 = arith.subf %35, %arg8 : vector<8x128xf32>
      %37 = arith.subf %36, %arg11 : vector<8x128xf32>
      %38 = arith.mulf %11, %arg7 : vector<8x128xf32>
      %39 = arith.addf %38, %15 : vector<8x128xf32>
      %40 = arith.subf %39, %arg9 : vector<8x128xf32>
      %41 = arith.subf %40, %arg12 : vector<8x128xf32>
      %42 = vector.broadcast %arg5 : vector<1x128xf32> to vector<8x128xf32>
      %43 = arith.subf %3, %42 : vector<8x128xf32>
      %44 = arith.subf %43, %arg6 : vector<8x128xf32>
      %45 = arith.addf %44, %arg13 : vector<8x128xf32>
      %46 = vector.broadcast %arg5 : vector<1x128xf32> to vector<8x128xf32>
      %47 = arith.subf %46, %arg7 : vector<8x128xf32>
      %48 = arith.addf %47, %arg14 : vector<8x128xf32>
      %49 = arith.subf %48, %3 : vector<8x128xf32>
      %50 = arith.subf %arg15, %arg5 : vector<1x128xf32>
      %51 = arith.subf %arg16, %arg6 : vector<8x128xf32>
      %52 = arith.subf %arg17, %arg7 : vector<8x128xf32>
      %53 = arith.mulf %arg8, %arg13 : vector<8x128xf32>
      %54 = arith.mulf %arg9, %arg14 : vector<8x128xf32>
      %55 = arith.addf %53, %54 : vector<8x128xf32>
      %56 = arith.mulf %arg11, %arg16 : vector<8x128xf32>
      %57 = arith.addf %55, %56 : vector<8x128xf32>
      %58 = arith.mulf %arg12, %arg17 : vector<8x128xf32>
      %59 = arith.addf %57, %58 : vector<8x128xf32>
      %cst_21 = arith.constant dense<0.000000e+00> : vector<128xf32>
      %60 = vector.multi_reduction <add>, %59, %cst_21 [0] : vector<8x128xf32> to vector<128xf32>
      %61 = vector.shape_cast %60 : vector<128xf32> to vector<1x128xf32>
      %62 = arith.mulf %arg10, %arg15 : vector<1x128xf32>
      %63 = arith.addf %61, %62 : vector<1x128xf32>
      %cst_22 = arith.constant 0.0303030312 : f32
      %64 = vector.broadcast %cst_22 : f32 to vector<1x128xf32>
      %65 = arith.mulf %63, %64 : vector<1x128xf32>
      %cst_23 = arith.constant 1.000000e-01 : f32
      %66 = vector.broadcast %cst_23 : f32 to vector<1x128xf32>
      %67 = arith.mulf %66, %65 : vector<1x128xf32>
      %68 = vector.shape_cast %67 : vector<1x128xf32> to vector<1x128xf32>
      %69 = vector.broadcast %68 : vector<1x128xf32> to vector<8x128xf32>
      %70 = vector.broadcast %cst_14 : f32 to vector<8x128xf32>
      %71 = arith.maximumf %arg13, %70 : vector<8x128xf32>
      %cst_24 = arith.constant 1.000000e+00 : f32
      %72 = vector.broadcast %cst_24 : f32 to vector<8x128xf32>
      %73 = arith.divf %72, %71 : vector<8x128xf32>
      %74 = vector.broadcast %cst_14 : f32 to vector<8x128xf32>
      %75 = arith.maximumf %arg14, %74 : vector<8x128xf32>
      %cst_25 = arith.constant 1.000000e+00 : f32
      %76 = vector.broadcast %cst_25 : f32 to vector<8x128xf32>
      %77 = arith.divf %76, %75 : vector<8x128xf32>
      %78 = vector.broadcast %cst_14 : f32 to vector<1x128xf32>
      %79 = arith.maximumf %arg15, %78 : vector<1x128xf32>
      %cst_26 = arith.constant 1.000000e+00 : f32
      %80 = vector.broadcast %cst_26 : f32 to vector<1x128xf32>
      %81 = arith.divf %80, %79 : vector<1x128xf32>
      %82 = vector.broadcast %cst_14 : f32 to vector<8x128xf32>
      %83 = arith.maximumf %arg16, %82 : vector<8x128xf32>
      %cst_27 = arith.constant 1.000000e+00 : f32
      %84 = vector.broadcast %cst_27 : f32 to vector<8x128xf32>
      %85 = arith.divf %84, %83 : vector<8x128xf32>
      %86 = vector.broadcast %cst_14 : f32 to vector<8x128xf32>
      %87 = arith.maximumf %arg17, %86 : vector<8x128xf32>
      %cst_28 = arith.constant 1.000000e+00 : f32
      %88 = vector.broadcast %cst_28 : f32 to vector<8x128xf32>
      %89 = arith.divf %88, %87 : vector<8x128xf32>
      %90 = arith.mulf %arg8, %73 : vector<8x128xf32>
      %91 = arith.mulf %arg9, %77 : vector<8x128xf32>
      %92 = arith.mulf %arg10, %81 : vector<1x128xf32>
      %93 = arith.mulf %arg11, %85 : vector<8x128xf32>
      %94 = arith.mulf %arg12, %89 : vector<8x128xf32>
      %95 = arith.mulf %arg8, %arg13 : vector<8x128xf32>
      %96 = arith.subf %95, %69 : vector<8x128xf32>
      %97 = arith.mulf %arg9, %arg14 : vector<8x128xf32>
      %98 = arith.subf %97, %69 : vector<8x128xf32>
      %99 = arith.mulf %arg10, %arg15 : vector<1x128xf32>
      %100 = arith.subf %99, %67 : vector<1x128xf32>
      %101 = arith.mulf %arg11, %arg16 : vector<8x128xf32>
      %102 = arith.subf %101, %69 : vector<8x128xf32>
      %103 = arith.mulf %arg12, %arg17 : vector<8x128xf32>
      %104 = arith.subf %103, %69 : vector<8x128xf32>
      %105 = arith.mulf %arg8, %45 : vector<8x128xf32>
      %106 = arith.subf %105, %96 : vector<8x128xf32>
      %107 = arith.mulf %106, %73 : vector<8x128xf32>
      %108 = arith.mulf %arg9, %49 : vector<8x128xf32>
      %109 = arith.subf %108, %98 : vector<8x128xf32>
      %110 = arith.mulf %109, %77 : vector<8x128xf32>
      %111 = arith.mulf %arg10, %50 : vector<1x128xf32>
      %112 = arith.subf %111, %100 : vector<1x128xf32>
      %113 = arith.mulf %112, %81 : vector<1x128xf32>
      %114 = arith.mulf %arg11, %51 : vector<8x128xf32>
      %115 = arith.subf %114, %102 : vector<8x128xf32>
      %116 = arith.mulf %115, %85 : vector<8x128xf32>
      %117 = arith.mulf %arg12, %52 : vector<8x128xf32>
      %118 = arith.subf %117, %104 : vector<8x128xf32>
      %119 = arith.mulf %118, %89 : vector<8x128xf32>
      %cst_29 = arith.constant 0.000000e+00 : f32
      %120 = vector.broadcast %cst_29 : f32 to vector<1x128xf32>
      %121 = arith.subf %120, %33 : vector<1x128xf32>
      %cst_30 = arith.constant dense<0.000000e+00> : vector<128xf32>
      %122 = vector.multi_reduction <add>, %107, %cst_30 [0] : vector<8x128xf32> to vector<128xf32>
      %123 = vector.shape_cast %122 : vector<128xf32> to vector<1x128xf32>
      %124 = arith.addf %121, %123 : vector<1x128xf32>
      %cst_31 = arith.constant dense<0.000000e+00> : vector<128xf32>
      %125 = vector.multi_reduction <add>, %110, %cst_31 [0] : vector<8x128xf32> to vector<128xf32>
      %126 = vector.shape_cast %125 : vector<128xf32> to vector<1x128xf32>
      %127 = arith.subf %124, %126 : vector<1x128xf32>
      %128 = arith.addf %127, %113 : vector<1x128xf32>
      %cst_32 = arith.constant 0.000000e+00 : f32
      %129 = vector.broadcast %cst_32 : f32 to vector<8x128xf32>
      %130 = arith.subf %129, %37 : vector<8x128xf32>
      %131 = arith.addf %130, %107 : vector<8x128xf32>
      %132 = arith.addf %131, %116 : vector<8x128xf32>
      %cst_33 = arith.constant 0.000000e+00 : f32
      %133 = vector.broadcast %cst_33 : f32 to vector<8x128xf32>
      %134 = arith.subf %133, %41 : vector<8x128xf32>
      %135 = arith.addf %134, %110 : vector<8x128xf32>
      %136 = arith.addf %135, %119 : vector<8x128xf32>
      %137 = arith.addf %7, %90 : vector<8x128xf32>
      %138 = arith.addf %137, %93 : vector<8x128xf32>
      %139 = arith.addf %11, %91 : vector<8x128xf32>
      %140 = arith.addf %139, %94 : vector<8x128xf32>
      %cst_34 = arith.constant 1.000000e+00 : f32
      %141 = vector.broadcast %cst_34 : f32 to vector<8x128xf32>
      %142 = arith.divf %141, %138 : vector<8x128xf32>
      %cst_35 = arith.constant 1.000000e+00 : f32
      %143 = vector.broadcast %cst_35 : f32 to vector<8x128xf32>
      %144 = arith.divf %143, %140 : vector<8x128xf32>
      %145 = vector.broadcast %cst_12 : f32 to vector<1x128xf32>
      %146 = arith.addf %145, %92 : vector<1x128xf32>
      %147 = arith.addf %7, %93 : vector<8x128xf32>
      %148 = arith.mulf %90, %147 : vector<8x128xf32>
      %149 = arith.mulf %148, %142 : vector<8x128xf32>
      %cst_36 = arith.constant dense<0.000000e+00> : vector<128xf32>
      %150 = vector.multi_reduction <add>, %149, %cst_36 [0] : vector<8x128xf32> to vector<128xf32>
      %151 = vector.shape_cast %150 : vector<128xf32> to vector<1x128xf32>
      %152 = arith.addf %146, %151 : vector<1x128xf32>
      %153 = arith.addf %11, %94 : vector<8x128xf32>
      %154 = arith.mulf %91, %153 : vector<8x128xf32>
      %155 = arith.mulf %154, %144 : vector<8x128xf32>
      %cst_37 = arith.constant dense<0.000000e+00> : vector<128xf32>
      %156 = vector.multi_reduction <add>, %155, %cst_37 [0] : vector<8x128xf32> to vector<128xf32>
      %157 = vector.shape_cast %156 : vector<128xf32> to vector<1x128xf32>
      %158 = arith.addf %152, %157 : vector<1x128xf32>
      %159 = arith.mulf %90, %132 : vector<8x128xf32>
      %160 = arith.mulf %159, %142 : vector<8x128xf32>
      %cst_38 = arith.constant dense<0.000000e+00> : vector<128xf32>
      %161 = vector.multi_reduction <add>, %160, %cst_38 [0] : vector<8x128xf32> to vector<128xf32>
      %162 = vector.shape_cast %161 : vector<128xf32> to vector<1x128xf32>
      %163 = arith.subf %128, %162 : vector<1x128xf32>
      %164 = arith.mulf %91, %136 : vector<8x128xf32>
      %165 = arith.mulf %164, %144 : vector<8x128xf32>
      %cst_39 = arith.constant dense<0.000000e+00> : vector<128xf32>
      %166 = vector.multi_reduction <add>, %165, %cst_39 [0] : vector<8x128xf32> to vector<128xf32>
      %167 = vector.shape_cast %166 : vector<128xf32> to vector<1x128xf32>
      %168 = arith.addf %163, %167 : vector<1x128xf32>
      %169 = arith.divf %168, %158 : vector<1x128xf32>
      %170 = vector.shape_cast %169 : vector<1x128xf32> to vector<1x128xf32>
      %171 = vector.broadcast %170 : vector<1x128xf32> to vector<8x128xf32>
      %172 = arith.mulf %90, %171 : vector<8x128xf32>
      %173 = arith.subf %132, %172 : vector<8x128xf32>
      %174 = arith.mulf %173, %142 : vector<8x128xf32>
      %175 = arith.mulf %91, %171 : vector<8x128xf32>
      %176 = arith.addf %136, %175 : vector<8x128xf32>
      %177 = arith.mulf %176, %144 : vector<8x128xf32>
      %178 = arith.addf %171, %174 : vector<8x128xf32>
      %cst_40 = arith.constant 0.000000e+00 : f32
      %179 = vector.broadcast %cst_40 : f32 to vector<8x128xf32>
      %180 = arith.subf %179, %178 : vector<8x128xf32>
      %181 = arith.subf %171, %177 : vector<8x128xf32>
      %cst_41 = arith.constant 0.000000e+00 : f32
      %182 = vector.broadcast %cst_41 : f32 to vector<1x128xf32>
      %183 = arith.subf %182, %169 : vector<1x128xf32>
      %cst_42 = arith.constant 0.000000e+00 : f32
      %184 = vector.broadcast %cst_42 : f32 to vector<8x128xf32>
      %185 = arith.subf %184, %174 : vector<8x128xf32>
      %cst_43 = arith.constant 0.000000e+00 : f32
      %186 = vector.broadcast %cst_43 : f32 to vector<8x128xf32>
      %187 = arith.subf %186, %177 : vector<8x128xf32>
      %188 = arith.addf %180, %45 : vector<8x128xf32>
      %189 = arith.mulf %arg8, %188 : vector<8x128xf32>
      %190 = arith.subf %189, %96 : vector<8x128xf32>
      %191 = arith.mulf %190, %73 : vector<8x128xf32>
      %192 = arith.addf %181, %49 : vector<8x128xf32>
      %193 = arith.mulf %arg9, %192 : vector<8x128xf32>
      %194 = arith.subf %193, %98 : vector<8x128xf32>
      %195 = arith.mulf %194, %77 : vector<8x128xf32>
      %196 = arith.addf %183, %50 : vector<1x128xf32>
      %197 = arith.mulf %arg10, %196 : vector<1x128xf32>
      %198 = arith.subf %197, %100 : vector<1x128xf32>
      %199 = arith.mulf %198, %81 : vector<1x128xf32>
      %200 = arith.addf %185, %51 : vector<8x128xf32>
      %201 = arith.mulf %arg11, %200 : vector<8x128xf32>
      %202 = arith.subf %201, %102 : vector<8x128xf32>
      %203 = arith.mulf %202, %85 : vector<8x128xf32>
      %204 = arith.addf %187, %52 : vector<8x128xf32>
      %205 = arith.mulf %arg12, %204 : vector<8x128xf32>
      %206 = arith.subf %205, %104 : vector<8x128xf32>
      %207 = arith.mulf %206, %89 : vector<8x128xf32>
      %cst_44 = arith.constant 0.000000e+00 : f32
      %208 = vector.broadcast %cst_44 : f32 to vector<8x128xf32>
      %209 = arith.subf %208, %45 : vector<8x128xf32>
      %210 = arith.subf %209, %180 : vector<8x128xf32>
      %cst_45 = arith.constant 0.000000e+00 : f32
      %211 = vector.broadcast %cst_45 : f32 to vector<8x128xf32>
      %212 = arith.subf %211, %49 : vector<8x128xf32>
      %213 = arith.subf %212, %181 : vector<8x128xf32>
      %cst_46 = arith.constant 0.000000e+00 : f32
      %214 = vector.broadcast %cst_46 : f32 to vector<1x128xf32>
      %215 = arith.subf %214, %50 : vector<1x128xf32>
      %216 = arith.subf %215, %183 : vector<1x128xf32>
      %cst_47 = arith.constant 0.000000e+00 : f32
      %217 = vector.broadcast %cst_47 : f32 to vector<8x128xf32>
      %218 = arith.subf %217, %51 : vector<8x128xf32>
      %219 = arith.subf %218, %185 : vector<8x128xf32>
      %cst_48 = arith.constant 0.000000e+00 : f32
      %220 = vector.broadcast %cst_48 : f32 to vector<8x128xf32>
      %221 = arith.subf %220, %52 : vector<8x128xf32>
      %222 = arith.subf %221, %187 : vector<8x128xf32>
      %cst_49 = arith.constant 0.000000e+00 : f32
      %223 = vector.broadcast %cst_49 : f32 to vector<8x128xf32>
      %224 = arith.cmpf olt, %191, %223 : vector<8x128xf32>
      %cst_50 = arith.constant -1.000000e+00 : f32
      %225 = vector.broadcast %cst_50 : f32 to vector<8x128xf32>
      %226 = arith.select %224, %191, %225 : vector<8x128xi1>, vector<8x128xf32>
      %cst_51 = arith.constant 0.000000e+00 : f32
      %227 = vector.broadcast %cst_51 : f32 to vector<8x128xf32>
      %228 = arith.subf %227, %arg8 : vector<8x128xf32>
      %229 = arith.divf %228, %226 : vector<8x128xf32>
      %230 = vector.broadcast %cst_15 : f32 to vector<8x128xf32>
      %231 = arith.select %224, %229, %230 : vector<8x128xi1>, vector<8x128xf32>
      %cst_52 = arith.constant 0.000000e+00 : f32
      %232 = vector.broadcast %cst_52 : f32 to vector<8x128xf32>
      %233 = arith.cmpf olt, %195, %232 : vector<8x128xf32>
      %cst_53 = arith.constant -1.000000e+00 : f32
      %234 = vector.broadcast %cst_53 : f32 to vector<8x128xf32>
      %235 = arith.select %233, %195, %234 : vector<8x128xi1>, vector<8x128xf32>
      %cst_54 = arith.constant 0.000000e+00 : f32
      %236 = vector.broadcast %cst_54 : f32 to vector<8x128xf32>
      %237 = arith.subf %236, %arg9 : vector<8x128xf32>
      %238 = arith.divf %237, %235 : vector<8x128xf32>
      %239 = vector.broadcast %cst_15 : f32 to vector<8x128xf32>
      %240 = arith.select %233, %238, %239 : vector<8x128xi1>, vector<8x128xf32>
      %241 = arith.minimumf %231, %240 : vector<8x128xf32>
      %cst_55 = arith.constant 0.000000e+00 : f32
      %242 = vector.broadcast %cst_55 : f32 to vector<8x128xf32>
      %243 = arith.cmpf olt, %203, %242 : vector<8x128xf32>
      %cst_56 = arith.constant -1.000000e+00 : f32
      %244 = vector.broadcast %cst_56 : f32 to vector<8x128xf32>
      %245 = arith.select %243, %203, %244 : vector<8x128xi1>, vector<8x128xf32>
      %cst_57 = arith.constant 0.000000e+00 : f32
      %246 = vector.broadcast %cst_57 : f32 to vector<8x128xf32>
      %247 = arith.subf %246, %arg11 : vector<8x128xf32>
      %248 = arith.divf %247, %245 : vector<8x128xf32>
      %249 = vector.broadcast %cst_15 : f32 to vector<8x128xf32>
      %250 = arith.select %243, %248, %249 : vector<8x128xi1>, vector<8x128xf32>
      %cst_58 = arith.constant 0.000000e+00 : f32
      %251 = vector.broadcast %cst_58 : f32 to vector<8x128xf32>
      %252 = arith.cmpf olt, %207, %251 : vector<8x128xf32>
      %cst_59 = arith.constant -1.000000e+00 : f32
      %253 = vector.broadcast %cst_59 : f32 to vector<8x128xf32>
      %254 = arith.select %252, %207, %253 : vector<8x128xi1>, vector<8x128xf32>
      %cst_60 = arith.constant 0.000000e+00 : f32
      %255 = vector.broadcast %cst_60 : f32 to vector<8x128xf32>
      %256 = arith.subf %255, %arg12 : vector<8x128xf32>
      %257 = arith.divf %256, %254 : vector<8x128xf32>
      %258 = vector.broadcast %cst_15 : f32 to vector<8x128xf32>
      %259 = arith.select %252, %257, %258 : vector<8x128xi1>, vector<8x128xf32>
      %260 = arith.minimumf %250, %259 : vector<8x128xf32>
      %261 = arith.minimumf %241, %260 : vector<8x128xf32>
      %cst_61 = arith.constant 0.000000e+00 : f32
      %262 = vector.broadcast %cst_61 : f32 to vector<8x128xf32>
      %263 = arith.cmpf olt, %210, %262 : vector<8x128xf32>
      %cst_62 = arith.constant -1.000000e+00 : f32
      %264 = vector.broadcast %cst_62 : f32 to vector<8x128xf32>
      %265 = arith.select %263, %210, %264 : vector<8x128xi1>, vector<8x128xf32>
      %cst_63 = arith.constant 0.000000e+00 : f32
      %266 = vector.broadcast %cst_63 : f32 to vector<8x128xf32>
      %267 = arith.subf %266, %arg13 : vector<8x128xf32>
      %268 = arith.divf %267, %265 : vector<8x128xf32>
      %269 = vector.broadcast %cst_15 : f32 to vector<8x128xf32>
      %270 = arith.select %263, %268, %269 : vector<8x128xi1>, vector<8x128xf32>
      %cst_64 = arith.constant 0.000000e+00 : f32
      %271 = vector.broadcast %cst_64 : f32 to vector<8x128xf32>
      %272 = arith.cmpf olt, %213, %271 : vector<8x128xf32>
      %cst_65 = arith.constant -1.000000e+00 : f32
      %273 = vector.broadcast %cst_65 : f32 to vector<8x128xf32>
      %274 = arith.select %272, %213, %273 : vector<8x128xi1>, vector<8x128xf32>
      %cst_66 = arith.constant 0.000000e+00 : f32
      %275 = vector.broadcast %cst_66 : f32 to vector<8x128xf32>
      %276 = arith.subf %275, %arg14 : vector<8x128xf32>
      %277 = arith.divf %276, %274 : vector<8x128xf32>
      %278 = vector.broadcast %cst_15 : f32 to vector<8x128xf32>
      %279 = arith.select %272, %277, %278 : vector<8x128xi1>, vector<8x128xf32>
      %280 = arith.minimumf %270, %279 : vector<8x128xf32>
      %cst_67 = arith.constant 0.000000e+00 : f32
      %281 = vector.broadcast %cst_67 : f32 to vector<8x128xf32>
      %282 = arith.cmpf olt, %219, %281 : vector<8x128xf32>
      %cst_68 = arith.constant -1.000000e+00 : f32
      %283 = vector.broadcast %cst_68 : f32 to vector<8x128xf32>
      %284 = arith.select %282, %219, %283 : vector<8x128xi1>, vector<8x128xf32>
      %cst_69 = arith.constant 0.000000e+00 : f32
      %285 = vector.broadcast %cst_69 : f32 to vector<8x128xf32>
      %286 = arith.subf %285, %arg16 : vector<8x128xf32>
      %287 = arith.divf %286, %284 : vector<8x128xf32>
      %288 = vector.broadcast %cst_15 : f32 to vector<8x128xf32>
      %289 = arith.select %282, %287, %288 : vector<8x128xi1>, vector<8x128xf32>
      %cst_70 = arith.constant 0.000000e+00 : f32
      %290 = vector.broadcast %cst_70 : f32 to vector<8x128xf32>
      %291 = arith.cmpf olt, %222, %290 : vector<8x128xf32>
      %cst_71 = arith.constant -1.000000e+00 : f32
      %292 = vector.broadcast %cst_71 : f32 to vector<8x128xf32>
      %293 = arith.select %291, %222, %292 : vector<8x128xi1>, vector<8x128xf32>
      %cst_72 = arith.constant 0.000000e+00 : f32
      %294 = vector.broadcast %cst_72 : f32 to vector<8x128xf32>
      %295 = arith.subf %294, %arg17 : vector<8x128xf32>
      %296 = arith.divf %295, %293 : vector<8x128xf32>
      %297 = vector.broadcast %cst_15 : f32 to vector<8x128xf32>
      %298 = arith.select %291, %296, %297 : vector<8x128xi1>, vector<8x128xf32>
      %299 = arith.minimumf %289, %298 : vector<8x128xf32>
      %300 = arith.minimumf %280, %299 : vector<8x128xf32>
      %301 = arith.minimumf %261, %300 : vector<8x128xf32>
      %cst_73 = arith.constant dense<0x7F800000> : vector<128xf32>
      %302 = vector.multi_reduction <minimumf>, %301, %cst_73 [0] : vector<8x128xf32> to vector<128xf32>
      %303 = vector.shape_cast %302 : vector<128xf32> to vector<1x128xf32>
      %cst_74 = arith.constant 0.000000e+00 : f32
      %304 = vector.broadcast %cst_74 : f32 to vector<1x128xf32>
      %305 = arith.cmpf olt, %199, %304 : vector<1x128xf32>
      %cst_75 = arith.constant -1.000000e+00 : f32
      %306 = vector.broadcast %cst_75 : f32 to vector<1x128xf32>
      %307 = arith.select %305, %199, %306 : vector<1x128xi1>, vector<1x128xf32>
      %cst_76 = arith.constant 0.000000e+00 : f32
      %308 = vector.broadcast %cst_76 : f32 to vector<1x128xf32>
      %309 = arith.subf %308, %arg10 : vector<1x128xf32>
      %310 = arith.divf %309, %307 : vector<1x128xf32>
      %311 = vector.broadcast %cst_15 : f32 to vector<1x128xf32>
      %312 = arith.select %305, %310, %311 : vector<1x128xi1>, vector<1x128xf32>
      %cst_77 = arith.constant 0.000000e+00 : f32
      %313 = vector.broadcast %cst_77 : f32 to vector<1x128xf32>
      %314 = arith.cmpf olt, %216, %313 : vector<1x128xf32>
      %cst_78 = arith.constant -1.000000e+00 : f32
      %315 = vector.broadcast %cst_78 : f32 to vector<1x128xf32>
      %316 = arith.select %314, %216, %315 : vector<1x128xi1>, vector<1x128xf32>
      %cst_79 = arith.constant 0.000000e+00 : f32
      %317 = vector.broadcast %cst_79 : f32 to vector<1x128xf32>
      %318 = arith.subf %317, %arg15 : vector<1x128xf32>
      %319 = arith.divf %318, %316 : vector<1x128xf32>
      %320 = vector.broadcast %cst_15 : f32 to vector<1x128xf32>
      %321 = arith.select %314, %319, %320 : vector<1x128xi1>, vector<1x128xf32>
      %322 = arith.minimumf %312, %321 : vector<1x128xf32>
      %323 = arith.minimumf %303, %322 : vector<1x128xf32>
      %cst_80 = arith.constant 9.900000e-01 : f32
      %324 = vector.broadcast %cst_80 : f32 to vector<1x128xf32>
      %325 = arith.mulf %324, %323 : vector<1x128xf32>
      %cst_81 = arith.constant 1.000000e+00 : f32
      %326 = vector.broadcast %cst_81 : f32 to vector<1x128xf32>
      %327 = arith.minimumf %326, %325 : vector<1x128xf32>
      %328 = vector.broadcast %cst_16 : f32 to vector<1x128xf32>
      %329 = arith.cmpf ogt, %65, %328 : vector<1x128xf32>
      %cst_82 = arith.constant 0.000000e+00 : f32
      %330 = vector.broadcast %cst_82 : f32 to vector<1x128xf32>
      %331 = arith.select %329, %327, %330 : vector<1x128xi1>, vector<1x128xf32>
      %332 = vector.shape_cast %331 : vector<1x128xf32> to vector<1x128xf32>
      %333 = vector.broadcast %332 : vector<1x128xf32> to vector<8x128xf32>
      %334 = arith.mulf %331, %169 : vector<1x128xf32>
      %335 = arith.addf %arg5, %334 : vector<1x128xf32>
      %336 = arith.mulf %333, %174 : vector<8x128xf32>
      %337 = arith.addf %arg6, %336 : vector<8x128xf32>
      %338 = arith.mulf %333, %177 : vector<8x128xf32>
      %339 = arith.addf %arg7, %338 : vector<8x128xf32>
      %340 = arith.mulf %333, %191 : vector<8x128xf32>
      %341 = arith.addf %arg8, %340 : vector<8x128xf32>
      %342 = arith.mulf %333, %195 : vector<8x128xf32>
      %343 = arith.addf %arg9, %342 : vector<8x128xf32>
      %344 = arith.mulf %331, %199 : vector<1x128xf32>
      %345 = arith.addf %arg10, %344 : vector<1x128xf32>
      %346 = arith.mulf %333, %203 : vector<8x128xf32>
      %347 = arith.addf %arg11, %346 : vector<8x128xf32>
      %348 = arith.mulf %333, %207 : vector<8x128xf32>
      %349 = arith.addf %arg12, %348 : vector<8x128xf32>
      %350 = arith.mulf %333, %210 : vector<8x128xf32>
      %351 = arith.addf %arg13, %350 : vector<8x128xf32>
      %352 = arith.mulf %333, %213 : vector<8x128xf32>
      %353 = arith.addf %arg14, %352 : vector<8x128xf32>
      %354 = arith.mulf %331, %216 : vector<1x128xf32>
      %355 = arith.addf %arg15, %354 : vector<1x128xf32>
      %356 = arith.mulf %333, %219 : vector<8x128xf32>
      %357 = arith.addf %arg16, %356 : vector<8x128xf32>
      %358 = arith.mulf %333, %222 : vector<8x128xf32>
      %359 = arith.addf %arg17, %358 : vector<8x128xf32>
      scf.yield %335, %337, %339, %341, %343, %345, %347, %349, %351, %353, %355, %357, %359 : vector<1x128xf32>, vector<8x128xf32>, vector<8x128xf32>, vector<8x128xf32>, vector<8x128xf32>, vector<1x128xf32>, vector<8x128xf32>, vector<8x128xf32>, vector<8x128xf32>, vector<8x128xf32>, vector<1x128xf32>, vector<8x128xf32>, vector<8x128xf32>
    }
    %c0_17 = arith.constant 0 : index
    %c0_18 = arith.constant 0 : index
    %22 = vector.load %arg3[%c0_17, %c0_18] : memref<1x128xf32, #tpu.memory_space<vmem>>, vector<1x128xf32>
    tpu.vector_store %arg3[%c0_17, %c0_18], %21#0 {strides = array<i32>} : memref<1x128xf32, #tpu.memory_space<vmem>>, vector<1x128xf32>,
    return
  }
  func.func @transform_0(%arg0: i32) -> (i32, i32) {
    %c0_i32 = arith.constant 0 : i32
    %c0_i32_0 = arith.constant 0 : i32
    %c0_i32_1 = arith.constant 0 : i32
    return %c0_i32, %c0_i32_0 : i32, i32
  }
  func.func @transform_1(%arg0: i32) -> (i32, i32) {
    %c0_i32 = arith.constant 0 : i32
    %c0_i32_0 = arith.constant 0 : i32
    return %c0_i32, %arg0 : i32, i32
  }
  func.func @transform_2(%arg0: i32) -> (i32, i32) {
    %c0_i32 = arith.constant 0 : i32
    %c0_i32_0 = arith.constant 0 : i32
    return %c0_i32, %arg0 : i32, i32
  }
}

</mosaic_0001>

<llo_original>
// kernel: forward.1
$region0: #{forward.1}
  #allocation0 [shape = 'u32[]', space=smem, size = 0x4, offset = 0x4, fixed_abs, tag = 'smem constant byte address 0x4 - core index']
  #allocation1 [shape = 'u32[144,128]{1,0:T(1,128)}', space=vmem, size = 0x12000, scoped, tag = 'internal scratch']
  %s0 = inlined_call_operand.vmem [shape: f32[8,1], index: 0, kind: input, shape index: {}]
  %s1 = inlined_call_operand.vmem [shape: f32[8,128], index: 1, kind: input, shape index: {}]
  %s2 = inlined_call_operand.vmem [shape: f32[1,128], index: 2, kind: output, shape index: {}]
  %s3 = sld [smem:[#allocation0]]
  $region25: #{forward.1} parent=0
    _
  %s5 = ssub.s32 1, %s3
  %s6 = scalar_select 0, %s5, %s3
  // Predicated region
  $region2: #{forward.1} parent=0 // pred_check
    _
  $region3: #{forward.1} parent=0 // pred_check_branch
    %8 = sbr.rel (0) target = $region5
  $region4: #{forward.1} parent=0 // pred_region
    _
  $region5: #{forward.1} parent=0 // pred_fallthru
    _
  // Predicated region
  $region6: #{forward.1} parent=0 // pred_check
    _
  $region7: #{forward.1} parent=0 // pred_check_branch
    %10 = sbr.rel (0) target = $region9
  $region8: #{forward.1} parent=0 // pred_region
    _
  $region9: #{forward.1} parent=0 // pred_fallthru
    _
  %v11 = vld [vmem:[%s1] sm:$0xff]
  %v12 = vld [vmem:[%s0] sm:$0xff]
  %14 = vset.pattern.permute.xlu0 0
  %15 = vperm.xlu0 %14, %v12
  %v16 = vpop.permute.xlu0 %15
  %v18 = vadd.f32 %v11, 1e-08
  %v19 = vmul.f32 %v18, 14.0
  %v20 = vmul.f32 %v18, 2.0
  %v21 = vmul.f32 %v11, 30.0
  %v22 = vmul.f32 %v11, 10.0
  loop: start=0, step=1, limit=40
  $region10: #{forward.1} parent=0 // loop_pre_header
    _
  $region11: #{forward.1} parent=0 // loop_header
    %s24 = sphi 0, %s28
    %p25 = scmp.ge.s32.totalorder %s24, 40
    %v29 = vphi 0.0, %v326
    %v30 = vphi 0.0, %v328
    %v31 = vphi 0.0, %v330
    %v32 = vphi 1.0, %v332
    %v33 = vphi 1.0, %v334
    %v34 = vphi 1.0, %v336
    %v35 = vphi 1.0, %v338
    %v36 = vphi 1.0, %v340
    %v37 = vphi 1.0, %v342
    %v38 = vphi 1.0, %v344
    %v39 = vphi 1.0, %v346
    %v40 = vphi 1.0, %v348
    %v41 = vphi 1.0, %v350
  $region12: #{forward.1} parent=0 // loop_header_branch
    %27 = sbr.rel (%p25) target = $region16
  $region13: #{forward.1} parent=0 // loop_body
    %v42 = vmul.f32 %v29, 2.0
    %v43 = vadd.f32 %v42, 10.0
    %v44 = vrot.slane %v32, 4
    %v45 = vadd.f32 %v32, %v44
    %v46 = vrot.slane %v45, 2
    %v47 = vadd.f32 %v45, %v46
    %v48 = vrot.slane %v47, 1
    %v49 = vadd.f32 %v47, %v48
    %v50 = vsub.f32 %v43, %v49
    %v51 = vrot.slane %v33, 4
    %v52 = vadd.f32 %v33, %v51
    %v53 = vrot.slane %v52, 2
    %v54 = vadd.f32 %v52, %v53
    %v55 = vrot.slane %v54, 1
    %v56 = vadd.f32 %v54, %v55
    %v57 = vadd.f32 %v50, %v56
    %v58 = vsub.f32 %v57, %v34
    %v59 = vmul.f32 %v19, %v30
    %v60 = vadd.f32 %v59, %v21
    %v61 = vsub.f32 %v60, %v32
    %v62 = vsub.f32 %v61, %v35
    %v63 = vmul.f32 %v20, %v31
    %v64 = vadd.f32 %v63, %v22
    %v65 = vsub.f32 %v64, %v33
    %v66 = vsub.f32 %v65, %v36
    %v67 = vsub.f32 %v16, %v29
    %v68 = vsub.f32 %v67, %v30
    %v69 = vadd.f32 %v68, %v37
    %v70 = vsub.f32 %v29, %v31
    %v71 = vadd.f32 %v70, %v38
    %v72 = vsub.f32 %v71, %v16
    %v73 = vsub.f32 %v39, %v29
    %v74 = vsub.f32 %v40, %v30
    %v75 = vsub.f32 %v41, %v31
    %v76 = vmul.f32 %v32, %v37
    %v77 = vmul.f32 %v33, %v38
    %v78 = vadd.f32 %v76, %v77
    %v79 = vmul.f32 %v35, %v40
    %v80 = vadd.f32 %v78, %v79
    %v81 = vmul.f32 %v36, %v41
    %v82 = vadd.f32 %v80, %v81
    %v83 = vrot.slane %v82, 4
    %v84 = vadd.f32 %v82, %v83
    %v85 = vrot.slane %v84, 2
    %v86 = vadd.f32 %v84, %v85
    %v87 = vrot.slane %v86, 1
    %v88 = vadd.f32 %v86, %v87
    %v89 = vmul.f32 %v34, %v39
    %v90 = vadd.f32 %v88, %v89
    %v91 = vmul.f32 %v90, 0.030303031
    %v92 = vmul.f32 %v91, 0.1
    %v93 = vmax.f32 %v37, 1e-12
    %v94 = vrcp.pop %v93
    %v95 = vmul.f32 1.0, %v94
    %v96 = vmax.f32 %v38, 1e-12
    %v97 = vrcp.pop %v96
    %v98 = vmul.f32 1.0, %v97
    %v99 = vmax.f32 %v39, 1e-12
    %v100 = vrcp.pop %v99
    %v101 = vmul.f32 1.0, %v100
    %v102 = vmax.f32 %v40, 1e-12
    %v103 = vrcp.pop %v102
    %v104 = vmul.f32 1.0, %v103
    %v105 = vmax.f32 %v41, 1e-12
    %v106 = vrcp.pop %v105
    %v107 = vmul.f32 1.0, %v106
    %v108 = vmul.f32 %v32, %v95
    %v109 = vmul.f32 %v33, %v98
    %v110 = vmul.f32 %v34, %v101
    %v111 = vmul.f32 %v35, %v104
    %v112 = vmul.f32 %v36, %v107
    %v113 = vsub.f32 %v76, %v92
    %v114 = vsub.f32 %v77, %v92
    %v115 = vsub.f32 %v89, %v92
    %v116 = vsub.f32 %v79, %v92
    %v117 = vsub.f32 %v81, %v92
    %v118 = vmul.f32 %v32, %v69
    %v119 = vsub.f32 %v118, %v113
    %v120 = vmul.f32 %v119, %v95
    %v121 = vmul.f32 %v33, %v72
    %v122 = vsub.f32 %v121, %v114
    %v123 = vmul.f32 %v122, %v98
    %v124 = vmul.f32 %v34, %v73
    %v125 = vsub.f32 %v124, %v115
    %v126 = vmul.f32 %v125, %v101
    %v127 = vmul.f32 %v35, %v74
    %v128 = vsub.f32 %v127, %v116
    %v129 = vmul.f32 %v128, %v104
    %v130 = vmul.f32 %v36, %v75
    %v131 = vsub.f32 %v130, %v117
    %v132 = vmul.f32 %v131, %v107
    %v133 = vsub.f32 0.0, %v58
    %v134 = vrot.slane %v120, 4
    %v135 = vadd.f32 %v120, %v134
    %v136 = vrot.slane %v135, 2
    %v137 = vadd.f32 %v135, %v136
    %v138 = vrot.slane %v137, 1
    %v139 = vadd.f32 %v137, %v138
    %v140 = vadd.f32 %v133, %v139
    %v141 = vrot.slane %v123, 4
    %v142 = vadd.f32 %v123, %v141
    %v143 = vrot.slane %v142, 2
    %v144 = vadd.f32 %v142, %v143
    %v145 = vrot.slane %v144, 1
    %v146 = vadd.f32 %v144, %v145
    %v147 = vsub.f32 %v140, %v146
    %v148 = vadd.f32 %v147, %v126
    %v149 = vsub.f32 0.0, %v62
    %v150 = vadd.f32 %v149, %v120
    %v151 = vadd.f32 %v150, %v129
    %v152 = vsub.f32 0.0, %v66
    %v153 = vadd.f32 %v152, %v123
    %v154 = vadd.f32 %v153, %v132
    %v155 = vadd.f32 %v19, %v108
    %v156 = vadd.f32 %v155, %v111
    %v157 = vadd.f32 %v20, %v109
    %v158 = vadd.f32 %v157, %v112
    %v159 = vrcp.pop %v156
    %v160 = vmul.f32 1.0, %v159
    %v161 = vrcp.pop %v158
    %v162 = vmul.f32 1.0, %v161
    %v163 = vadd.f32 %v110, 2.0
    %v164 = vadd.f32 %v19, %v111
    %v165 = vmul.f32 %v108, %v164
    %v166 = vmul.f32 %v165, %v160
    %v167 = vrot.slane %v166, 4
    %v168 = vadd.f32 %v166, %v167
    %v169 = vrot.slane %v168, 2
    %v170 = vadd.f32 %v168, %v169
    %v171 = vrot.slane %v170, 1
    %v172 = vadd.f32 %v170, %v171
    %v173 = vadd.f32 %v163, %v172
    %v174 = vadd.f32 %v20, %v112
    %v175 = vmul.f32 %v109, %v174
    %v176 = vmul.f32 %v175, %v162
    %v177 = vrot.slane %v176, 4
    %v178 = vadd.f32 %v176, %v177
    %v179 = vrot.slane %v178, 2
    %v180 = vadd.f32 %v178, %v179
    %v181 = vrot.slane %v180, 1
    %v182 = vadd.f32 %v180, %v181
    %v183 = vadd.f32 %v173, %v182
    %v184 = vmul.f32 %v108, %v151
    %v185 = vmul.f32 %v184, %v160
    %v186 = vrot.slane %v185, 4
    %v187 = vadd.f32 %v185, %v186
    %v188 = vrot.slane %v187, 2
    %v189 = vadd.f32 %v187, %v188
    %v190 = vrot.slane %v189, 1
    %v191 = vadd.f32 %v189, %v190
    %v192 = vsub.f32 %v148, %v191
    %v193 = vmul.f32 %v109, %v154
    %v194 = vmul.f32 %v193, %v162
    %v195 = vrot.slane %v194, 4
    %v196 = vadd.f32 %v194, %v195
    %v197 = vrot.slane %v196, 2
    %v198 = vadd.f32 %v196, %v197
    %v199 = vrot.slane %v198, 1
    %v200 = vadd.f32 %v198, %v199
    %v201 = vadd.f32 %v192, %v200
    %v202 = vrcp.pop %v183
    %v203 = vmul.f32 %v201, %v202
    %v204 = vmul.f32 %v108, %v203
    %v205 = vsub.f32 %v151, %v204
    %v206 = vmul.f32 %v205, %v160
    %v207 = vmul.f32 %v109, %v203
    %v208 = vadd.f32 %v154, %v207
    %v209 = vmul.f32 %v208, %v162
    %v210 = vadd.f32 %v203, %v206
    %v211 = vsub.f32 0.0, %v210
    %v212 = vsub.f32 %v203, %v209
    %v213 = vsub.f32 0.0, %v203
    %v214 = vsub.f32 0.0, %v206
    %v215 = vsub.f32 0.0, %v209
    %v216 = vadd.f32 %v211, %v69
    %v217 = vmul.f32 %v32, %v216
    %v218 = vsub.f32 %v217, %v113
    %v219 = vmul.f32 %v218, %v95
    %v220 = vadd.f32 %v212, %v72
    %v221 = vmul.f32 %v33, %v220
    %v222 = vsub.f32 %v221, %v114
    %v223 = vmul.f32 %v222, %v98
    %v224 = vadd.f32 %v213, %v73
    %v225 = vmul.f32 %v34, %v224
    %v226 = vsub.f32 %v225, %v115
    %v227 = vmul.f32 %v226, %v101
    %v228 = vadd.f32 %v214, %v74
    %v229 = vmul.f32 %v35, %v228
    %v230 = vsub.f32 %v229, %v116
    %v231 = vmul.f32 %v230, %v104
    %v232 = vadd.f32 %v215, %v75
    %v233 = vmul.f32 %v36, %v232
    %v234 = vsub.f32 %v233, %v117
    %v235 = vmul.f32 %v234, %v107
    %v236 = vsub.f32 0.0, %v69
    %v237 = vsub.f32 %v236, %v211
    %v238 = vsub.f32 0.0, %v72
    %v239 = vsub.f32 %v238, %v212
    %v240 = vsub.f32 0.0, %v73
    %v241 = vsub.f32 %v240, %v213
    %v242 = vsub.f32 0.0, %v74
    %v243 = vsub.f32 %v242, %v214
    %v244 = vsub.f32 0.0, %v75
    %v245 = vsub.f32 %v244, %v215
    %vm246 = vcmp.lt.f32.partialorder %v219, 0.0
    %v247 = vsel %vm246, %v219, -1.0
    %v248 = vsub.f32 0.0, %v32
    %v249 = vrcp.pop %v247
    %v250 = vmul.f32 %v248, %v249
    %v251 = vsel %vm246, %v250, 1e+30
    %vm252 = vcmp.lt.f32.partialorder %v223, 0.0
    %v253 = vsel %vm252, %v223, -1.0
    %v254 = vsub.f32 0.0, %v33
    %v255 = vrcp.pop %v253
    %v256 = vmul.f32 %v254, %v255
    %v257 = vsel %vm252, %v256, 1e+30
    %v258 = vmin.f32 %v251, %v257
    %vm259 = vcmp.lt.f32.partialorder %v231, 0.0
    %v260 = vsel %vm259, %v231, -1.0
    %v261 = vsub.f32 0.0, %v35
    %v262 = vrcp.pop %v260
    %v263 = vmul.f32 %v261, %v262
    %v264 = vsel %vm259, %v263, 1e+30
    %vm265 = vcmp.lt.f32.partialorder %v235, 0.0
    %v266 = vsel %vm265, %v235, -1.0
    %v267 = vsub.f32 0.0, %v36
    %v268 = vrcp.pop %v266
    %v269 = vmul.f32 %v267, %v268
    %v270 = vsel %vm265, %v269, 1e+30
    %v271 = vmin.f32 %v264, %v270
    %v272 = vmin.f32 %v258, %v271
    %vm273 = vcmp.lt.f32.partialorder %v237, 0.0
    %v274 = vsel %vm273, %v237, -1.0
    %v275 = vsub.f32 0.0, %v37
    %v276 = vrcp.pop %v274
    %v277 = vmul.f32 %v275, %v276
    %v278 = vsel %vm273, %v277, 1e+30
    %vm279 = vcmp.lt.f32.partialorder %v239, 0.0
    %v280 = vsel %vm279, %v239, -1.0
    %v281 = vsub.f32 0.0, %v38
    %v282 = vrcp.pop %v280
    %v283 = vmul.f32 %v281, %v282
    %v284 = vsel %vm279, %v283, 1e+30
    %v285 = vmin.f32 %v278, %v284
    %vm286 = vcmp.lt.f32.partialorder %v243, 0.0
    %v287 = vsel %vm286, %v243, -1.0
    %v288 = vsub.f32 0.0, %v40
    %v289 = vrcp.pop %v287
    %v290 = vmul.f32 %v288, %v289
    %v291 = vsel %vm286, %v290, 1e+30
    %vm292 = vcmp.lt.f32.partialorder %v245, 0.0
    %v293 = vsel %vm292, %v245, -1.0
    %v294 = vsub.f32 0.0, %v41
    %v295 = vrcp.pop %v293
    %v296 = vmul.f32 %v294, %v295
    %v297 = vsel %vm292, %v296, 1e+30
    %v298 = vmin.f32 %v291, %v297
    %v299 = vmin.f32 %v285, %v298
    %v300 = vmin.f32 %v272, %v299
    %v301 = vrot.slane %v300, 4
    %v302 = vmin.f32 %v300, %v301
    %v303 = vrot.slane %v302, 2
    %v304 = vmin.f32 %v302, %v303
    %v305 = vrot.slane %v304, 1
    %v306 = vmin.f32 %v304, %v305
    %vm307 = vcmp.lt.f32.partialorder %v227, 0.0
    %v308 = vsel %vm307, %v227, -1.0
    %v309 = vsub.f32 0.0, %v34
    %v310 = vrcp.pop %v308
    %v311 = vmul.f32 %v309, %v310
    %v312 = vsel %vm307, %v311, 1e+30
    %vm313 = vcmp.lt.f32.partialorder %v241, 0.0
    %v314 = vsel %vm313, %v241, -1.0
    %v315 = vsub.f32 0.0, %v39
    %v316 = vrcp.pop %v314
    %v317 = vmul.f32 %v315, %v316
    %v318 = vsel %vm313, %v317, 1e+30
    %v319 = vmin.f32 %v312, %v318
    %v320 = vmin.f32 %v306, %v319
    %v321 = vmul.f32 %v320, 0.99
    %v322 = vmin.f32 %v321, 1.0
    %vm323 = vcmp.gt.f32.partialorder %v91, 1e-08
    %v324 = vsel %vm323, %v322, 0.0
    %v325 = vmul.f32 %v324, %v203
    %v326 = vadd.f32 %v29, %v325
    %v327 = vmul.f32 %v324, %v206
    %v328 = vadd.f32 %v30, %v327
    %v329 = vmul.f32 %v324, %v209
    %v330 = vadd.f32 %v31, %v329
    %v331 = vmul.f32 %v324, %v219
    %v332 = vadd.f32 %v32, %v331
    %v333 = vmul.f32 %v324, %v223
    %v334 = vadd.f32 %v33, %v333
    %v335 = vmul.f32 %v324, %v227
    %v336 = vadd.f32 %v34, %v335
    %v337 = vmul.f32 %v324, %v231
    %v338 = vadd.f32 %v35, %v337
    %v339 = vmul.f32 %v324, %v235
    %v340 = vadd.f32 %v36, %v339
    %v341 = vmul.f32 %v324, %v237
    %v342 = vadd.f32 %v37, %v341
    %v343 = vmul.f32 %v324, %v239
    %v344 = vadd.f32 %v38, %v343
    %v345 = vmul.f32 %v324, %v241
    %v346 = vadd.f32 %v39, %v345
    %v347 = vmul.f32 %v324, %v243
    %v348 = vadd.f32 %v40, %v347
    %v349 = vmul.f32 %v324, %v245
    %v350 = vadd.f32 %v41, %v349
  $region14: #{forward.1} parent=0 // loop_footer
    %s28 = sadd.s32 1, %s24
  $region15: #{forward.1} parent=0 // loop_footer_branch
    %23 = sbr.rel target = $region11
  $region16: #{forward.1} parent=0 // loop_exit
    _
  %351 = vst [vmem:[%s2] sm:$0x1] %v29
  // Predicated region
  $region17: #{forward.1} parent=0 // pred_check
    _
  $region18: #{forward.1} parent=0 // pred_check_branch
    %353 = sbr.rel (0) target = $region20
  $region19: #{forward.1} parent=0 // pred_region
    _
  $region20: #{forward.1} parent=0 // pred_fallthru
    _
  // Predicated region
  $region21: #{forward.1} parent=0 // pred_check
    _
  $region22: #{forward.1} parent=0 // pred_check_branch
    %355 = sbr.rel (0) target = $region24
  $region23: #{forward.1} parent=0 // pred_region
    _
  $region24: #{forward.1} parent=0 // pred_fallthru
    _

</llo_original>
